<compile_context>
chip_gen: v6e
topology: v6e:2x2x1
jax: 0.10.0
libtpu: 0.0.40
codegen_flags: <defaults>
</compile_context>

<pallas_src>
import functools

import jax
import jax.numpy as jnp
from jax import lax
from jax.experimental import pallas as pl
from jax.experimental.pallas import tpu as pltpu

LANES = 128
SUB_ELEMS = 64 * 1024        # ~256 KiB f32 per in-kernel sub-chunk temporary
TILE_ELEMS = 1024 * 1024     # ~4 MiB f32 per input DMA tile per grid step
MIN_BN = 512                 # keep DMA tiles lane-dense even for tall inputs
BN_CAP = 32 * 1024           # cap lane-dim block (bounds accumulators/temps)
VMEM_LIMIT_BYTES = 40 * 1024 * 1024   # conservative for v7x's 64 MiB/TC


def _round_up(a, b):
    return ((a + b - 1) // b) * b


def _sublane_multiple(*dtypes):
    # Required second-to-last tile multiple: f32 -> 8, bf16 -> 16, int8 -> 32.
    m = 8
    for dt in dtypes:
        m = max(m, 32 // jnp.dtype(dt).itemsize)
    return m


def _num_tensorcores():
    """2 TensorCores per chip on v7x; 1 on v5e/v6e. Defaults to 1 if unknown."""
    try:
        kind = getattr(jax.devices()[0], "device_kind", "") or ""
        if "v7" in kind.lower():
            return 2
    except Exception:
        pass
    return 1


def _choose_tiling(B, N, row_mult):
    rows_padded = _round_up(B, row_mult)
    # Lane-dim block: multiple of 128; large enough to hit ~TILE_ELEMS even
    # when B is small, but capped so accumulators/temporaries stay bounded.
    target_bn = max(MIN_BN,
                    _round_up(max(TILE_ELEMS // rows_padded, LANES), LANES))
    bn = min(_round_up(N, LANES), target_bn, BN_CAP)
    # Rows per in-kernel sub-chunk (multiple of the sublane tile).
    sub = max(row_mult, (SUB_ELEMS // bn) // row_mult * row_mult)
    sub = min(sub, rows_padded)
    # Rows per DMA tile: integer number of sub-chunks, ~TILE_ELEMS elements.
    n_sub = max(1, min(TILE_ELEMS // (sub * bn), pl.cdiv(rows_padded, sub)))
    tb = sub * n_sub
    return bn, tb, sub


def _bce_kernel(x_ref, t_ref, pos_ref, lsum_ref, *, B, N, tb, bn, sub, steps_b):
    c = pl.program_id(0)   # core-split axis
    i = pl.program_id(1)   # row-tile within core
    j = pl.program_id(2)   # col-tile

    @pl.when((i == 0) & (j == 0))
    def _init():
        pos_ref[...] = jnp.zeros_like(pos_ref)
        lsum_ref[...] = jnp.zeros_like(lsum_ref)

    # Global offsets of this tile.  row0 uses the UNCLAMPED block index, so a
    # core's overflow tile (clamped to a duplicate block by the index_map) is
    # fully masked and contributes exactly zero.
    row0 = (c * steps_b + i) * tb
    col0 = j * bn

    lane_idx = lax.broadcasted_iota(jnp.int32, (sub, bn), 1)
    row_idx = lax.broadcasted_iota(jnp.int32, (sub, bn), 0)
    lane_ok = (col0 + lane_idx) < N

    n_sub = tb // sub

    def body(k, carry):
        r = pl.multiple_of(k * sub, sub)
        x = x_ref[pl.ds(r, sub), :].astype(jnp.float32)
        t = t_ref[pl.ds(r, sub), :].astype(jnp.float32)

        valid = lane_ok & ((row0 + r + row_idx) < B)
        is_pos = (t == 1.0) & valid
        # One log per element; invalid (edge-padding) elements forced to
        # z = 1.0 -> -log(1.0 + 1e-14) == 0 exactly in f32, so they cannot
        # pollute the sums even if the OOB data is garbage / NaN.
        z = jnp.where(is_pos, x, 1.0 - x)
        z = jnp.where(valid, z, 1.0)
        l = -jnp.log(z + 1e-14)
        pos_e = jnp.where(is_pos, l, 0.0)

        # (sub, bn) -> (8, bn): layout-preserving reshape + pure VPU vreg adds
        # into the resident lane-dense accumulator blocks.
        lsum_ref[...] += l.reshape(sub // 8, 8, bn).sum(axis=0)
        pos_ref[...] += pos_e.reshape(sub // 8, 8, bn).sum(axis=0)
        return carry

    lax.fori_loop(0, n_sub, body, None, unroll=True)


def _partial_sums(x, t, num_cores):
    B, N = x.shape
    row_mult = _sublane_multiple(x.dtype, t.dtype)
    bn, tb, sub = _choose_tiling(B, N, row_mult)

    grid_b = pl.cdiv(B, tb)                # total row tiles
    steps_b = pl.cdiv(grid_b, num_cores)   # row tiles per core
    grid_n = pl.cdiv(N, bn)
    last_b = grid_b - 1

    def in_map(c, i, j):
        bi = c * steps_b + i
        # Clamp so a core's overflow step never issues a fully OOB DMA; the
        # kernel masks that step's contribution to zero (see row0 above).
        return (jnp.minimum(bi, last_b), j)

    in_spec = pl.BlockSpec((tb, bn), in_map)
    out_spec = pl.BlockSpec((8, bn), lambda c, i, j: (c, 0))

    kernel = functools.partial(_bce_kernel, B=B, N=N, tb=tb, bn=bn, sub=sub,
                               steps_b=steps_b)

    if num_cores > 1:
        semantics = (pltpu.CORE_PARALLEL, pltpu.ARBITRARY, pltpu.ARBITRARY)
    else:
        semantics = ("arbitrary", "arbitrary", "arbitrary")

    pos_part, l_part = pl.pallas_call(
        kernel,
        out_shape=(
            jax.ShapeDtypeStruct((num_cores * 8, bn), jnp.float32),
            jax.ShapeDtypeStruct((num_cores * 8, bn), jnp.float32),
        ),
        grid=(num_cores, steps_b, grid_n),
        in_specs=[in_spec, in_spec],
        out_specs=(out_spec, out_spec),
        compiler_params=pltpu.CompilerParams(
            dimension_semantics=semantics,
            vmem_limit_bytes=VMEM_LIMIT_BYTES,
        ),
    )(x, t)
    return pos_part, l_part


def bce_loss(inputs, targets, reduction="mean"):
    """Pallas implementation of BCELoss.forward with reduction='mean'.

    inputs:  (B, N) probabilities in (0, 1), float32 (bf16 also accepted).
    targets: (B, N) hard 0/1 labels (float32 / bf16 / int8 all work).
    Returns (pos_loss, neg_loss) as float32 scalars.
    """
    assert reduction == "mean", "only reduction='mean' is implemented in-kernel"
    assert inputs.ndim == 2 and inputs.shape == targets.shape
    B = inputs.shape[0]

    num_cores = _num_tensorcores()
    if num_cores > 1:
        try:
            pos_part, l_part = _partial_sums(inputs, targets, num_cores)
        except Exception:
            # CORE_PARALLEL split unavailable on this part / jax version.
            pos_part, l_part = _partial_sums(inputs, targets, 1)
    else:
        pos_part, l_part = _partial_sums(inputs, targets, 1)

    # Tiny finalize in plain JAX: cross-lane/core reduction + mean over batch.
    inv_b = jnp.float32(1.0 / B)
    pos_sum = jnp.sum(pos_part)
    total_sum = jnp.sum(l_part)
    pos_loss = pos_sum * inv_b
    neg_loss = (total_sum - pos_sum) * inv_b
    return pos_loss, neg_loss


def _reference(inputs, targets):
    pos_id = (targets == 1.0).astype(jnp.float32)
    neg_id = 1.0 - pos_id
    pos_loss = -pos_id * jnp.log(inputs + 1e-14)
    neg_loss = -neg_id * jnp.log(1.0 - inputs + 1e-14)
    return (jnp.mean(jnp.sum(pos_loss, axis=1)),
            jnp.mean(jnp.sum(neg_loss, axis=1)))


if __name__ == "__main__":
    key = jax.random.PRNGKey(0)
    ok = True
    # Second / third shapes exercise the ragged-edge (sublane + lane) masking.
    for (B, N) in [(8, 256), (7, 193), (2, 64)]:
        k1, k2, key = jax.random.split(key, 3)
        inputs = jax.random.uniform(k1, (B, N), dtype=jnp.float32,
                                    minval=0.01, maxval=0.99)
        targets = (jax.random.uniform(k2, (B, N)) > 0.5).astype(jnp.float32)

        pos_loss, neg_loss = bce_loss(inputs, targets)
        jax.block_until_ready((pos_loss, neg_loss))

        ref_pos, ref_neg = _reference(inputs, targets)
        ok &= bool(jnp.allclose(pos_loss, ref_pos, rtol=1e-4, atol=1e-4))
        ok &= bool(jnp.allclose(neg_loss, ref_neg, rtol=1e-4, atol=1e-4))
        assert ok, ((B, N), (float(pos_loss), float(ref_pos)),
                    (float(neg_loss), float(ref_neg)))

    print("KERNEL_OK")
</pallas_src>

<mosaic_0001>
module attributes {stable_mosaic.version = 11 : i64} {
  func.func @_bce_kernel(%arg0: i32, %arg1: i32, %arg2: i32, %arg3: memref<8x256xf32, #tpu.memory_space<vmem>>, %arg4: memref<8x256xf32, #tpu.memory_space<vmem>>, %arg5: memref<8x256xf32, #tpu.memory_space<vmem>>, %arg6: memref<8x256xf32, #tpu.memory_space<vmem>>) attributes {dimension_semantics = [#tpu.dimension_semantics<arbitrary>, #tpu.dimension_semantics<arbitrary>, #tpu.dimension_semantics<arbitrary>], iteration_bounds = array<i64: 1, 1, 1>, scalar_prefetch = 0 : i64, scratch_operands = 0 : i64, tpu.core_type = #tpu.core_type<tc>, window_params = [{transform_indices = @transform_0, window_bounds = array<i64: 8, 256>}, {transform_indices = @transform_1, window_bounds = array<i64: 8, 256>}, {transform_indices = @transform_2, window_bounds = array<i64: 8, 256>}, {transform_indices = @transform_3, window_bounds = array<i64: 8, 256>}]} {
    %c0_i32 = arith.constant 0 : i32
    %0 = arith.cmpi eq, %arg1, %c0_i32 : i32
    %c0_i32_0 = arith.constant 0 : i32
    %1 = arith.cmpi eq, %arg2, %c0_i32_0 : i32
    %2 = arith.andi %0, %1 : i1
    %3 = arith.extui %2 : i1 to i32
    %c0_i32_1 = arith.constant 0 : i32
    %4 = arith.cmpi ne, %3, %c0_i32_1 : i32
    scf.if %4 {
      %cst_23 = arith.constant 0.000000e+00 : f32
      %52 = vector.broadcast %cst_23 : f32 to vector<8x256xf32>
      %c0_24 = arith.constant 0 : index
      %c0_25 = arith.constant 0 : index
      %53 = vector.load %arg5[%c0_24, %c0_25] : memref<8x256xf32, #tpu.memory_space<vmem>>, vector<8x256xf32>
      tpu.vector_store %arg5[%c0_24, %c0_25], %52 {strides = array<i32>} : memref<8x256xf32, #tpu.memory_space<vmem>>, vector<8x256xf32>,
      %cst_26 = arith.constant 0.000000e+00 : f32
      %54 = vector.broadcast %cst_26 : f32 to vector<8x256xf32>
      %c0_27 = arith.constant 0 : index
      %c0_28 = arith.constant 0 : index
      %55 = vector.load %arg6[%c0_27, %c0_28] : memref<8x256xf32, #tpu.memory_space<vmem>>, vector<8x256xf32>
      tpu.vector_store %arg6[%c0_27, %c0_28], %54 {strides = array<i32>} : memref<8x256xf32, #tpu.memory_space<vmem>>, vector<8x256xf32>,
    } else {
    }
    %c1_i32 = arith.constant 1 : i32
    %5 = arith.muli %arg0, %c1_i32 : i32
    %6 = arith.addi %5, %arg1 : i32
    %c8_i32 = arith.constant 8 : i32
    %7 = arith.muli %6, %c8_i32 : i32
    %c256_i32 = arith.constant 256 : i32
    %8 = arith.muli %arg2, %c256_i32 : i32
    %9 = tpu.iota {dimensions = array<i32: 1>} : vector<8x256xi32>
    %10 = tpu.iota {dimensions = array<i32: 0>} : vector<8x256xi32>
    %11 = vector.broadcast %8 : i32 to vector<8x256xi32>
    %12 = arith.addi %11, %9 : vector<8x256xi32>
    %c256_i32_2 = arith.constant 256 : i32
    %13 = vector.broadcast %c256_i32_2 : i32 to vector<8x256xi32>
    %14 = arith.cmpi slt, %12, %13 : vector<8x256xi32>
    %c0_i32_3 = arith.constant 0 : i32
    %c8_i32_4 = arith.constant 8 : i32
    %15 = arith.muli %c0_i32_3, %c8_i32_4 : i32
    %16 = tpu.assume_multiple %15, 8 : i32
    %17 = arith.index_cast %16 : i32 to index
    %c0 = arith.constant 0 : index
    %18 = vector.load %arg3[%17, %c0] : memref<8x256xf32, #tpu.memory_space<vmem>>, vector<8x256xf32>
    %19 = arith.index_cast %16 : i32 to index
    %c0_5 = arith.constant 0 : index
    %20 = vector.load %arg4[%19, %c0_5] : memref<8x256xf32, #tpu.memory_space<vmem>>, vector<8x256xf32>
    %21 = arith.addi %7, %16 : i32
    %22 = vector.broadcast %21 : i32 to vector<8x256xi32>
    %23 = arith.addi %22, %10 : vector<8x256xi32>
    %c8_i32_6 = arith.constant 8 : i32
    %24 = vector.broadcast %c8_i32_6 : i32 to vector<8x256xi32>
    %25 = arith.cmpi slt, %23, %24 : vector<8x256xi32>
    %26 = arith.andi %14, %25 : vector<8x256xi1>
    %cst = arith.constant 1.000000e+00 : f32
    %27 = vector.broadcast %cst : f32 to vector<8x256xf32>
    %28 = arith.cmpf oeq, %20, %27 : vector<8x256xf32>
    %29 = arith.andi %28, %26 : vector<8x256xi1>
    %cst_7 = arith.constant 1.000000e+00 : f32
    %30 = vector.broadcast %cst_7 : f32 to vector<8x256xf32>
    %31 = arith.subf %30, %18 : vector<8x256xf32>
    %32 = arith.select %29, %18, %31 : vector<8x256xi1>, vector<8x256xf32>
    %cst_8 = arith.constant 1.000000e+00 : f32
    %33 = vector.broadcast %cst_8 : f32 to vector<8x256xf32>
    %34 = arith.select %26, %32, %33 : vector<8x256xi1>, vector<8x256xf32>
    %cst_9 = arith.constant 9.99999982E-15 : f32
    %35 = vector.broadcast %cst_9 : f32 to vector<8x256xf32>
    %36 = arith.addf %34, %35 : vector<8x256xf32>
    %37 = math.log %36 : vector<8x256xf32>
    %cst_10 = arith.constant 0.000000e+00 : f32
    %38 = vector.broadcast %cst_10 : f32 to vector<8x256xf32>
    %39 = arith.subf %38, %37 : vector<8x256xf32>
    %cst_11 = arith.constant 0.000000e+00 : f32
    %40 = vector.broadcast %cst_11 : f32 to vector<8x256xf32>
    %41 = arith.select %29, %39, %40 : vector<8x256xi1>, vector<8x256xf32>
    %c0_12 = arith.constant 0 : index
    %c0_13 = arith.constant 0 : index
    %42 = vector.load %arg6[%c0_12, %c0_13] : memref<8x256xf32, #tpu.memory_space<vmem>>, vector<8x256xf32>
    %43 = vector.shape_cast %39 : vector<8x256xf32> to vector<1x8x256xf32>
    %cst_14 = arith.constant dense<0.000000e+00> : vector<8x256xf32>
    %44 = vector.multi_reduction <add>, %43, %cst_14 [0] : vector<1x8x256xf32> to vector<8x256xf32>
    %45 = arith.addf %42, %44 : vector<8x256xf32>
    %c0_15 = arith.constant 0 : index
    %c0_16 = arith.constant 0 : index
    %46 = vector.load %arg6[%c0_15, %c0_16] : memref<8x256xf32, #tpu.memory_space<vmem>>, vector<8x256xf32>
    tpu.vector_store %arg6[%c0_15, %c0_16], %45 {strides = array<i32>} : memref<8x256xf32, #tpu.memory_space<vmem>>, vector<8x256xf32>,
    %c0_17 = arith.constant 0 : index
    %c0_18 = arith.constant 0 : index
    %47 = vector.load %arg5[%c0_17, %c0_18] : memref<8x256xf32, #tpu.memory_space<vmem>>, vector<8x256xf32>
    %48 = vector.shape_cast %41 : vector<8x256xf32> to vector<1x8x256xf32>
    %cst_19 = arith.constant dense<0.000000e+00> : vector<8x256xf32>
    %49 = vector.multi_reduction <add>, %48, %cst_19 [0] : vector<1x8x256xf32> to vector<8x256xf32>
    %50 = arith.addf %47, %49 : vector<8x256xf32>
    %c0_20 = arith.constant 0 : index
    %c0_21 = arith.constant 0 : index
    %51 = vector.load %arg5[%c0_20, %c0_21] : memref<8x256xf32, #tpu.memory_space<vmem>>, vector<8x256xf32>
    tpu.vector_store %arg5[%c0_20, %c0_21], %50 {strides = array<i32>} : memref<8x256xf32, #tpu.memory_space<vmem>>, vector<8x256xf32>,
    %c1_i32_22 = arith.constant 1 : i32
    return
  }
  func.func @transform_0(%arg0: i32, %arg1: i32, %arg2: i32) -> (i32, i32) {
    %c1_i32 = arith.constant 1 : i32
    %0 = arith.muli %arg0, %c1_i32 : i32
    %1 = arith.addi %0, %arg1 : i32
    %c0_i32 = arith.constant 0 : i32
    %2 = arith.minsi %1, %c0_i32 : i32
    %c0_i32_0 = arith.constant 0 : i32
    return %2, %arg2 : i32, i32
  }
  func.func @transform_1(%arg0: i32, %arg1: i32, %arg2: i32) -> (i32, i32) {
    %c1_i32 = arith.constant 1 : i32
    %0 = arith.muli %arg0, %c1_i32 : i32
    %1 = arith.addi %0, %arg1 : i32
    %c0_i32 = arith.constant 0 : i32
    %2 = arith.minsi %1, %c0_i32 : i32
    %c0_i32_0 = arith.constant 0 : i32
    return %2, %arg2 : i32, i32
  }
  func.func @transform_2(%arg0: i32, %arg1: i32, %arg2: i32) -> (i32, i32) {
    %c0_i32 = arith.constant 0 : i32
    %c0_i32_0 = arith.constant 0 : i32
    return %arg0, %c0_i32 : i32, i32
  }
  func.func @transform_3(%arg0: i32, %arg1: i32, %arg2: i32) -> (i32, i32) {
    %c0_i32 = arith.constant 0 : i32
    %c0_i32_0 = arith.constant 0 : i32
    return %arg0, %c0_i32 : i32, i32
  }
}

</mosaic_0001>

<llo_original>
// kernel: tpu_custom_call.1
$region0: #{tpu_custom_call.1}
  #allocation0 [shape = 'u32[]', space=smem, size = 0x4, offset = 0x4, fixed_abs, tag = 'smem constant byte address 0x4 - core index']
  #allocation1 [shape = 'u32[144,128]{1,0:T(1,128)}', space=vmem, size = 0x12000, scoped, tag = 'internal scratch']
  %s0 = inlined_call_operand.hbm [shape: f32[8,256], index: 0, kind: input, shape index: {}]
  %s1 = inlined_call_operand.hbm [shape: f32[8,256], index: 1, kind: input, shape index: {}]
  %s2 = inlined_call_operand.hbm [shape: f32[8,256], index: 2, kind: output, shape index: {0}]
  %s3 = inlined_call_operand.hbm [shape: f32[8,256], index: 3, kind: output, shape index: {1}]
  %4 = xla_tuple %s2, %s3
  %s5 = sld [smem:[#allocation0]]
  $region38: #{tpu_custom_call.1} parent=0
    _
  %s7 = ssub.s32 1, %s5
  %s8 = scalar_select 0, %s7, %s5
  $region1: #{tpu_custom_call.1} parent=0
    #allocation2 [shape = 'u8[8192]{0}', space=vmem, size = 0x2000, scoped, tag = 'input window, operand 0, single buffered']
    #allocation3 [shape = 's32[1]{0}', space=sflag, size = 0x4, scoped, tag = 'scoped memory for tpu_custom_call.1']
    #allocation4 [shape = 's32[1]{0}', space=sflag, size = 0x4, scoped, tag = 'scoped memory for tpu_custom_call.1']
    #allocation5 [shape = 'u8[8192]{0}', space=vmem, size = 0x2000, scoped, tag = 'input window, operand 1, single buffered']
    #allocation6 [shape = 's32[1]{0}', space=sflag, size = 0x4, scoped, tag = 'scoped memory for tpu_custom_call.1']
    #allocation7 [shape = 'u8[8192]{0}', space=vmem, size = 0x2000, scoped, tag = 'output window, operand 0, single buffered']
    #allocation8 [shape = 'u8[8192]{0}', space=vmem, size = 0x2000, scoped, tag = 'output window, operand 1, single buffered']
    #allocation9 [shape = 's32[1]{0}', space=sflag, size = 0x4, scoped, tag = 'scoped memory for tpu_custom_call.1']
    %9 = vsyncpa [#allocation3], 0
    %10 = vsyncpa [#allocation6], 0
    %11 = vsyncpa [#allocation4], 0
    %12 = vsyncpa [#allocation9], 0
    // Predicated region
    $region2: #{tpu_custom_call.1} parent=1 // pred_check
      _
    $region3: #{tpu_custom_call.1} parent=1 // pred_check_branch
      %14 = sbr.rel (0) target = $region5
    $region4: #{tpu_custom_call.1} parent=1 // pred_region
      %s15 = sadd.s32 0, 0
      %p16 = scmp.lt.s32.totalorder %s15, 0
      %s17 = scalar_select %p16, %s15, 0
      %s19 = ssub.s32 256, 256
      %20 = vsyncadd [#allocation3], %s19
      %s21 = smul.addr %s17, 2
      %s22 = smul.addr %s21, 128
      %s23 = scalar_lea.hbm %s0, %s22
      %s25 = sshll.u32 [#allocation2], 4
      %s26 = int_to_ptr.vmem [resolvable:$true] %s25
      %28 = dma.hbm_to_vmem [thread:$0]  %s23, 256, %s26, [#allocation3]
    $region5: #{tpu_custom_call.1} parent=1 // pred_fallthru
      _
    // Predicated region
    $region6: #{tpu_custom_call.1} parent=1 // pred_check
      _
    $region7: #{tpu_custom_call.1} parent=1 // pred_check_branch
      %30 = sbr.rel (0) target = $region9
    $region8: #{tpu_custom_call.1} parent=1 // pred_region
      %s31 = sadd.s32 0, 0
      %p32 = scmp.lt.s32.totalorder %s31, 0
      %s33 = scalar_select %p32, %s31, 0
      %s35 = ssub.s32 256, 256
      %36 = vsyncadd [#allocation6], %s35
      %s37 = smul.addr %s33, 2
      %s38 = smul.addr %s37, 128
      %s39 = scalar_lea.hbm %s1, %s38
      %s41 = sshll.u32 [#allocation5], 4
      %s42 = int_to_ptr.vmem [resolvable:$true] %s41
      %44 = dma.hbm_to_vmem [thread:$0]  %s39, 256, %s42, [#allocation6]
    $region9: #{tpu_custom_call.1} parent=1 // pred_fallthru
      _
    // Predicated region
    $region10: #{tpu_custom_call.1} parent=1 // pred_check
      _
    $region11: #{tpu_custom_call.1} parent=1 // pred_check_branch
      %46 = sbr.rel (0) target = $region13
    $region12: #{tpu_custom_call.1} parent=1 // pred_region
      %47 = dma.done [#allocation3], 256
    $region13: #{tpu_custom_call.1} parent=1 // pred_fallthru
      _
    // Predicated region
    $region14: #{tpu_custom_call.1} parent=1 // pred_check
      _
    $region15: #{tpu_custom_call.1} parent=1 // pred_check_branch
      %49 = sbr.rel (0) target = $region17
    $region16: #{tpu_custom_call.1} parent=1 // pred_region
      %50 = dma.done [#allocation6], 256
    $region17: #{tpu_custom_call.1} parent=1 // pred_fallthru
      _
    %s51 = sadd.s32 0, 0
    %p52 = scmp.lt.s32.totalorder %s51, 0
    %s53 = scalar_select %p52, %s51, 0
    %s54 = sadd.s32 0, 0
    %p55 = scmp.lt.s32.totalorder %s54, 0
    %s56 = scalar_select %p55, %s54, 0
    %p57 = scmp.eq.s32.totalorder 0, 0
    %p58 = scmp.eq.s32.totalorder 0, 0
    %p59 = pnand %p57, %p58
    %p60 = pneg %p59
    // Predicated region
    $region18: #{tpu_custom_call.1} parent=1 // pred_check
      _
    $region19: #{tpu_custom_call.1} parent=1 // pred_check_branch
      %62 = sbr.rel (%p59) target = $region21
    $region20: #{tpu_custom_call.1} parent=1 // pred_region
      %63 = vst [vmem:[#allocation7] sm:$0xff] 0.0
      %64 = vst [vmem:[#allocation7 + $0x8] sm:$0xff] 0.0
      %65 = vst [vmem:[#allocation8] sm:$0xff] 0.0
      %66 = vst [vmem:[#allocation8 + $0x8] sm:$0xff] 0.0
    $region21: #{tpu_custom_call.1} parent=1 // pred_fallthru
      _
    %s67 = sadd.s32 0, 0
    %s68 = smul.u32 %s67, 8
    %s69 = smul.u32 0, 256
    %v70 = vlaneseq
    %v71 = vand.u32 %v70, 127
    %v72 = vadd.s32 %v71, 128
    %v73 = vlaneseq
    %v74 = vshrl.u32 %v73, 7
    %v75 = vstv %s69
    %v76 = vadd.s32 %v75, %v71
    %v77 = vadd.s32 %v75, %v72
    %vm78 = vcmp.lt.s32.totalorder %v76, 256
    %vm79 = vcmp.lt.s32.totalorder %v77, 256
    %s80 = smul.u32 0, 2
    %s81 = smul.addr %s80, 8
    %s82 = scalar_lea.vmem [#allocation2], %s81
    %v83 = vld [vmem:[%s82] sm:$0xff]
    %v84 = vld [vmem:[%s82 + $0x8] sm:$0xff]
    %s85 = smul.addr %s80, 8
    %s86 = scalar_lea.vmem [#allocation5], %s85
    %v87 = vld [vmem:[%s86] sm:$0xff]
    %v88 = vld [vmem:[%s86 + $0x8] sm:$0xff]
    %s89 = sadd.s32 %s68, 0
    %v90 = vstv %s89
    %v91 = vadd.s32 %v90, %v74
    %vm92 = vcmp.lt.s32.totalorder %v91, 8
    %vm93 = vmand %vm78, %vm92
    %vm94 = vmand %vm79, %vm92
    %vm95 = vcmp.eq.f32.partialorder %v87, 1.0
    %vm96 = vcmp.eq.f32.partialorder %v88, 1.0
    %vm97 = vmand %vm95, %vm93
    %vm98 = vmand %vm96, %vm94
    %v99 = vsub.f32 1.0, %v83
    %v100 = vsub.f32 1.0, %v84
    %v101 = vsel %vm97, %v83, %v99
    %v102 = vsel %vm98, %v84, %v100
    %v103 = vsel %vm93, %v101, 1.0
    %v104 = vsel %vm94, %v102, 1.0
    %v105 = vadd.f32 %v103, 1e-14
    %v106 = vadd.f32 %v104, 1e-14
    %v107 = vlog2.pop %v105
    %v108 = vmul.f32 %v107, 0.6931472
    %v109 = vlog2.pop %v106
    %v110 = vmul.f32 %v109, 0.6931472
    %v111 = vsub.f32 0.0, %v108
    %v112 = vsub.f32 0.0, %v110
    %v113 = vsel %vm97, %v111, 0.0
    %v114 = vsel %vm98, %v112, 0.0
    %v115 = vld [vmem:[#allocation8] sm:$0xff]
    %v116 = vld [vmem:[#allocation8 + $0x8] sm:$0xff]
    %v117 = vadd.f32 %v111, 0.0
    %v118 = vadd.f32 %v112, 0.0
    %v119 = vadd.f32 %v115, %v117
    %v120 = vadd.f32 %v116, %v118
    %121 = vst [vmem:[#allocation8] sm:$0xff] %v119
    %122 = vst [vmem:[#allocation8 + $0x8] sm:$0xff] %v120
    %v123 = vld [vmem:[#allocation7] sm:$0xff]
    %v124 = vld [vmem:[#allocation7 + $0x8] sm:$0xff]
    %v125 = vadd.f32 %v113, 0.0
    %v126 = vadd.f32 %v114, 0.0
    %v127 = vadd.f32 %v123, %v125
    %v128 = vadd.f32 %v124, %v126
    %129 = vst [vmem:[#allocation7] sm:$0xff] %v127
    %130 = vst [vmem:[#allocation7 + $0x8] sm:$0xff] %v128
    // Predicated region
    $region22: #{tpu_custom_call.1} parent=1 // pred_check
      _
    $region23: #{tpu_custom_call.1} parent=1 // pred_check_branch
      %132 = sbr.rel (0) target = $region25
    $region24: #{tpu_custom_call.1} parent=1 // pred_region
      %s134 = ssub.s32 256, 256
      %135 = vsyncadd [#allocation4], %s134
      %s137 = sshll.u32 [#allocation7], 4
      %s138 = int_to_ptr.vmem [resolvable:$true] %s137
      %140 = dma.vmem_to_hbm [thread:$0]  %s138, 256, %s2, [#allocation4]
    $region25: #{tpu_custom_call.1} parent=1 // pred_fallthru
      _
    // Predicated region
    $region26: #{tpu_custom_call.1} parent=1 // pred_check
      _
    $region27: #{tpu_custom_call.1} parent=1 // pred_check_branch
      %142 = sbr.rel (0) target = $region29
    $region28: #{tpu_custom_call.1} parent=1 // pred_region
      %s144 = ssub.s32 256, 256
      %145 = vsyncadd [#allocation9], %s144
      %s147 = sshll.u32 [#allocation8], 4
      %s148 = int_to_ptr.vmem [resolvable:$true] %s147
      %150 = dma.vmem_to_hbm [thread:$0]  %s148, 256, %s3, [#allocation9]
    $region29: #{tpu_custom_call.1} parent=1 // pred_fallthru
      _
    // Predicated region
    $region30: #{tpu_custom_call.1} parent=1 // pred_check
      _
    $region31: #{tpu_custom_call.1} parent=1 // pred_check_branch
      %152 = sbr.rel (0) target = $region33
    $region32: #{tpu_custom_call.1} parent=1 // pred_region
      %153 = dma.done [#allocation4], 256
    $region33: #{tpu_custom_call.1} parent=1 // pred_fallthru
      _
    // Predicated region
    $region34: #{tpu_custom_call.1} parent=1 // pred_check
      _
    $region35: #{tpu_custom_call.1} parent=1 // pred_check_branch
      %155 = sbr.rel (0) target = $region37
    $region36: #{tpu_custom_call.1} parent=1 // pred_region
      %156 = dma.done [#allocation9], 256
    $region37: #{tpu_custom_call.1} parent=1 // pred_fallthru
      _
    %157 = vsyncpa [#allocation3], 1
    %158 = vsyncpa [#allocation6], 1
    %159 = vsyncpa [#allocation4], 1
    %160 = vsyncpa [#allocation9], 1

</llo_original>
